<compile_context>
chip_gen: v7x
topology: tpu7x:2x2x1
jax: 0.10.0
libtpu: 0.0.40
codegen_flags: <defaults>
</compile_context>

<pallas_src>
import jax
import jax.numpy as jnp
from jax.experimental import pallas as pl
from jax.experimental.pallas import tpu as pltpu


def cross_en_kernel(sim_ref, out_ref):
    i = pl.program_id(0)
    tm, n = sim_ref.shape                              # block rows, full width

    s = sim_ref[...].astype(jnp.float32)               # (TM, N)

    # Numerically stable row-wise max and logsumexp over the full width.
    m = jnp.max(s, axis=-1, keepdims=True)             # (TM, 1)
    lse = jnp.log(jnp.sum(jnp.exp(s - m), axis=-1, keepdims=True))

    # Diagonal pick via one-hot select.  The column iota is a single (1, N)
    # row broadcast against the (TM, 1) global row index.
    col = jax.lax.broadcasted_iota(jnp.int32, (1, n), 1)          # (1, N)
    local_row = jax.lax.broadcasted_iota(jnp.int32, (tm, 1), 0)   # (TM, 1)
    global_row = i * tm + local_row                               # (TM, 1)
    s_diag = jnp.sum(jnp.where(col == global_row, s, jnp.float32(0.0)),
                     axis=-1, keepdims=True)                      # (TM, 1)

    # Per-row diag(log_softmax).  Padded rows of a ragged last block compute
    # garbage (their reads hit the padded tile region), so zero them; their
    # writes also land outside the (N, 1) output and are dropped.
    row_valid = global_row < n
    out_ref[...] = jnp.where(row_valid, s_diag - m - lse, jnp.float32(0.0))


def _row_block(n: int, itemsize: int,
               footprint_budget_bytes: int = 12 * 1024 * 1024) -> int:
    """Rows per grid step.

    Footprint per row ~= 2*N*itemsize (double-buffered input tile)
                       + 2*N*4       (in-kernel f32 copy + exp temporary).
    Budget of ~12 MiB stays comfortably under the explicit 32 MiB VMEM limit
    set below (safe on v5e/v6e 128 MiB and v7x 64 MiB physical VMEM).
    """
    bytes_per_row = 2 * n * itemsize + 8 * n
    tm = footprint_budget_bytes // max(bytes_per_row, 1)
    # Sublane-packing-aware rounding: 8 rows for 32-bit, 16 for 16-bit,
    # 32 for 8-bit dtypes.
    mult = 8 if itemsize >= 4 else (16 if itemsize == 2 else 32)
    tm = (tm // mult) * mult
    tm = max(mult, min(tm, 1024))
    if tm >= n:
        return n   # single full block (legal for any n, including n < 8)
    # TODO(synk): for extremely large N (~>250k rows f32) even the minimum
    # row block exceeds the budget; that regime needs a column-tiled 2D grid
    # with an online logsumexp.
    return tm


def cross_en(sim_matrix: jax.Array, *, tm: int | None = None) -> jax.Array:
    """Pallas equivalent of CrossEn.forward; returns a scalar float32."""
    assert sim_matrix.ndim == 2 and sim_matrix.shape[0] == sim_matrix.shape[1], (
        "CrossEn expects a square similarity matrix")
    n = sim_matrix.shape[0]
    if tm is None:
        tm = _row_block(n, sim_matrix.dtype.itemsize)
    tm = min(tm, n)
    if tm < n:
        assert tm % 8 == 0, "row block must be a multiple of 8 when tiling"

    per_row = pl.pallas_call(
        cross_en_kernel,
        out_shape=jax.ShapeDtypeStruct((n, 1), jnp.float32),
        grid=(pl.cdiv(n, tm),),
        in_specs=[pl.BlockSpec((tm, n), lambda i: (i, 0))],
        out_specs=pl.BlockSpec((tm, 1), lambda i: (i, 0)),
        compiler_params=pltpu.CompilerParams(
            dimension_semantics=("parallel",),
            vmem_limit_bytes=32 * 1024 * 1024,
        ),
    )(sim_matrix)
    # per_row[r, 0] = log_softmax(sim)[r, r]; tiny XLA reduce finalizes.
    return -jnp.sum(per_row) / jnp.float32(n)


def cross_en_ref(sim_matrix: jax.Array) -> jax.Array:
    """Pure-JAX reference for validation."""
    logpt = jax.nn.log_softmax(sim_matrix.astype(jnp.float32), axis=-1)
    return jnp.mean(-jnp.diagonal(logpt))


if __name__ == "__main__":
    key = jax.random.PRNGKey(0)
    k0, k1, k2 = jax.random.split(key, 3)

    # Case 1: small single-block case (typical CrossEn batch), auto TM.
    n1 = 8
    sim1 = jax.random.normal(k0, (n1, n1), dtype=jnp.float32) * 3.0
    out1 = jax.block_until_ready(cross_en(sim1))
    ref1 = jax.block_until_ready(cross_en_ref(sim1))
    assert jnp.allclose(out1, ref1, atol=1e-5, rtol=1e-5), (out1, ref1)

    # Case 2: multi-block with a ragged last block (40 rows, TM=16 -> 3 blocks,
    # last block half-padded) to exercise the parallel per-row-output path.
    n2 = 40
    sim2 = jax.random.normal(k1, (n2, n2), dtype=jnp.float32) * 3.0
    out2 = jax.block_until_ready(cross_en(sim2, tm=16))
    ref2 = jax.block_until_ready(cross_en_ref(sim2))
    assert jnp.allclose(out2, ref2, atol=1e-5, rtol=1e-5), (out2, ref2)

    # Case 3: multi-block, exactly divisible (48 rows, TM=16).
    n3 = 48
    sim3 = jax.random.normal(k2, (n3, n3), dtype=jnp.float32) * 3.0
    out3 = jax.block_until_ready(cross_en(sim3, tm=16))
    ref3 = jax.block_until_ready(cross_en_ref(sim3))
    assert jnp.allclose(out3, ref3, atol=1e-5, rtol=1e-5), (out3, ref3)

    # Case 4: bf16 input (cast to f32 happens inside the kernel).
    sim4 = sim2.astype(jnp.bfloat16)
    out4 = jax.block_until_ready(cross_en(sim4, tm=16))
    ref4 = jax.block_until_ready(cross_en_ref(sim4))
    assert jnp.allclose(out4, ref4, atol=1e-4, rtol=1e-4), (out4, ref4)

    print("KERNEL_OK")
</pallas_src>

<mosaic_0001>
module attributes {stable_mosaic.version = 11 : i64} {
  func.func @cross_en_kernel(%arg0: i32, %arg1: memref<8x8xf32, #tpu.memory_space<vmem>>, %arg2: memref<8x1xf32, #tpu.memory_space<vmem>>) attributes {dimension_semantics = [#tpu.dimension_semantics<parallel>], iteration_bounds = array<i64: 1>, scalar_prefetch = 0 : i64, scratch_operands = 0 : i64, tpu.core_type = #tpu.core_type<tc>, window_params = [{transform_indices = @transform_0, window_bounds = array<i64: 8, 8>}, {transform_indices = @transform_1, window_bounds = array<i64: 8, 1>}]} {
    %c0 = arith.constant 0 : index
    %c0_0 = arith.constant 0 : index
    %0 = vector.load %arg1[%c0, %c0_0] : memref<8x8xf32, #tpu.memory_space<vmem>>, vector<8x8xf32>
    %cst = arith.constant dense<0xFF800000> : vector<8xf32>
    %1 = vector.multi_reduction <maximumf>, %0, %cst [1] : vector<8x8xf32> to vector<8xf32>
    %2 = vector.shape_cast %1 : vector<8xf32> to vector<8x1xf32>
    %3 = vector.broadcast %2 : vector<8x1xf32> to vector<8x8xf32>
    %4 = arith.subf %0, %3 : vector<8x8xf32>
    %5 = math.exp %4 : vector<8x8xf32>
    %cst_1 = arith.constant dense<0.000000e+00> : vector<8xf32>
    %6 = vector.multi_reduction <add>, %5, %cst_1 [1] : vector<8x8xf32> to vector<8xf32>
    %7 = vector.shape_cast %6 : vector<8xf32> to vector<8x1xf32>
    %8 = math.log %7 : vector<8x1xf32>
    %9 = tpu.iota {dimensions = array<i32: 1>} : vector<1x8xi32>
    %10 = tpu.iota {dimensions = array<i32: 0>} : vector<8x1xi32>
    %c8_i32 = arith.constant 8 : i32
    %11 = arith.muli %arg0, %c8_i32 : i32
    %12 = vector.broadcast %11 : i32 to vector<8x1xi32>
    %13 = arith.addi %12, %10 : vector<8x1xi32>
    %14 = vector.broadcast %9 : vector<1x8xi32> to vector<8x8xi32>
    %15 = vector.broadcast %13 : vector<8x1xi32> to vector<8x8xi32>
    %16 = arith.cmpi eq, %14, %15 : vector<8x8xi32>
    %cst_2 = arith.constant 0.000000e+00 : f32
    %17 = vector.broadcast %cst_2 : f32 to vector<8x8xf32>
    %18 = arith.select %16, %0, %17 : vector<8x8xi1>, vector<8x8xf32>
    %cst_3 = arith.constant dense<0.000000e+00> : vector<8xf32>
    %19 = vector.multi_reduction <add>, %18, %cst_3 [1] : vector<8x8xf32> to vector<8xf32>
    %20 = vector.shape_cast %19 : vector<8xf32> to vector<8x1xf32>
    %c8_i32_4 = arith.constant 8 : i32
    %21 = vector.broadcast %c8_i32_4 : i32 to vector<8x1xi32>
    %22 = arith.cmpi slt, %13, %21 : vector<8x1xi32>
    %23 = arith.subf %20, %2 : vector<8x1xf32>
    %24 = arith.subf %23, %8 : vector<8x1xf32>
    %cst_5 = arith.constant 0.000000e+00 : f32
    %25 = vector.broadcast %cst_5 : f32 to vector<8x1xf32>
    %26 = arith.select %22, %24, %25 : vector<8x1xi1>, vector<8x1xf32>
    %c0_6 = arith.constant 0 : index
    %c0_7 = arith.constant 0 : index
    %27 = vector.load %arg2[%c0_6, %c0_7] : memref<8x1xf32, #tpu.memory_space<vmem>>, vector<8x1xf32>
    tpu.vector_store %arg2[%c0_6, %c0_7], %26 {strides = array<i32>} : memref<8x1xf32, #tpu.memory_space<vmem>>, vector<8x1xf32>,
    return
  }
  func.func @transform_0(%arg0: i32) -> (i32, i32) {
    %c0_i32 = arith.constant 0 : i32
    %c0_i32_0 = arith.constant 0 : i32
    return %arg0, %c0_i32 : i32, i32
  }
  func.func @transform_1(%arg0: i32) -> (i32, i32) {
    %c0_i32 = arith.constant 0 : i32
    %c0_i32_0 = arith.constant 0 : i32
    return %arg0, %c0_i32 : i32, i32
  }
}

</mosaic_0001>

<llo_original>
// kernel: tpu_custom_call.1
$region0: #{tpu_custom_call.1}
  #allocation0 [shape = 'u32[]', space=smem, size = 0x4, offset = 0x4, fixed_abs, tag = 'smem constant byte address 0x4 - core index']
  #allocation1 [shape = 'u32[144,128]{1,0:T(1,128)}', space=vmem, size = 0x12000, scoped, tag = 'internal scratch']
  %s0 = inlined_call_operand.hbm [shape: f32[8,8], index: 0, kind: input, shape index: {}]
  %s1 = inlined_call_operand.vmem [shape: f32[8,1], index: 1, kind: output, shape index: {}]
  %s2 = sld [smem:[#allocation0]]
  $region18: #{tpu_custom_call.1} parent=0
    _
  %s4 = ssub.s32 1, %s2
  %s5 = scalar_select 0, %s4, %s2
  $region1: #{tpu_custom_call.1} parent=0
    #allocation2 [shape = 'u8[4096]{0}', space=vmem, size = 0x1000, scoped, tag = 'input window, operand 0, single buffered']
    #allocation3 [shape = 's32[1]{0}', space=sflag, size = 0x4, scoped, tag = 'scoped memory for tpu_custom_call.1']
    %6 = vsyncpa [#allocation3], 0
    // Predicated region
    $region2: #{tpu_custom_call.1} parent=1 // pred_check
      _
    $region3: #{tpu_custom_call.1} parent=1 // pred_check_branch
      %8 = sbr.rel (0) target = $region5
    $region4: #{tpu_custom_call.1} parent=1 // pred_region
      %s10 = ssub.s32 128, 128
      %11 = vsyncadd [#allocation3], %s10
      %s13 = sshll.u32 [#allocation2], 4
      %s14 = int_to_ptr.vmem [resolvable:$true] %s13
      %16 = dma.hbm_to_vmem [thread:$0]  %s0, 128, %s14, [#allocation3]
    $region5: #{tpu_custom_call.1} parent=1 // pred_fallthru
      _
    // Predicated region
    $region6: #{tpu_custom_call.1} parent=1 // pred_check
      _
    $region7: #{tpu_custom_call.1} parent=1 // pred_check_branch
      %18 = sbr.rel (0) target = $region9
    $region8: #{tpu_custom_call.1} parent=1 // pred_region
      %19 = dma.done [#allocation3], 128
    $region9: #{tpu_custom_call.1} parent=1 // pred_fallthru
      _
    %v20 = vld [vmem:[#allocation2] sm:$0xff]
    %vm21 = vcmask 64512
    %v22 = vsel %vm21, %v20, -inf
    %23 = vmax.xlane.f32.xlu0 %v22
    %v24 = vpop.xlane.xlu0 %23
    %v25 = vsub.f32 %v20, %v24
    %v26 = vmul.f32 %v25, 1.442695
    %v27 = vpow.pop %v26
    %v28 = vsel %vm21, %v27, 0.0
    %29 = vadd.xlane.f32.xlu0 %v28
    %v30 = vpop.xlane.xlu0 %29
    %v31 = vlog2.pop %v30
    %v32 = vmul.f32 %v31, 0.6931472
    %v33 = vlaneseq
    %v34 = vand.u32 %v33, 127
    %v35 = vlaneseq
    %v36 = vshrl.u32 %v35, 7
    %s37 = smul.u32 0, 8
    %v38 = vstv %s37
    %v39 = vadd.s32 %v38, %v36
    %vm40 = vcmp.eq.s32.totalorder %v34, %v39
    %v41 = vsel %vm40, %v20, 0.0
    %v42 = vsel %vm21, %v41, 0.0
    %43 = vadd.xlane.f32.xlu0 %v42
    %v44 = vpop.xlane.xlu0 %43
    %vm45 = vcmp.lt.s32.totalorder %v39, 8
    %v46 = vsub.f32 %v44, %v24
    %v47 = vsub.f32 %v46, %v32
    %v48 = vsel %vm45, %v47, 0.0
    %vm49 = vcmask 7168
    %50 = vst.msk [vmem:[%s1] sm:$0xff] %vm49, %v48
    // Predicated region
    $region10: #{tpu_custom_call.1} parent=1 // pred_check
      _
    $region11: #{tpu_custom_call.1} parent=1 // pred_check_branch
      %52 = sbr.rel (0) target = $region13
    $region12: #{tpu_custom_call.1} parent=1 // pred_region
      _
    $region13: #{tpu_custom_call.1} parent=1 // pred_fallthru
      _
    // Predicated region
    $region14: #{tpu_custom_call.1} parent=1 // pred_check
      _
    $region15: #{tpu_custom_call.1} parent=1 // pred_check_branch
      %54 = sbr.rel (0) target = $region17
    $region16: #{tpu_custom_call.1} parent=1 // pred_region
      _
    $region17: #{tpu_custom_call.1} parent=1 // pred_fallthru
      _
    %55 = vsyncpa [#allocation3], 1

</llo_original>
